<compile_context>
chip_gen: v6e
topology: v6e:2x2x1
jax: 0.10.0
libtpu: 0.0.40
codegen_flags: <defaults>
</compile_context>

<pallas_src>
import jax
import jax.numpy as jnp
from jax.experimental import pallas as pl
from jax.experimental.pallas import tpu as pltpu


def _mlp_logsoftmax_kernel(x_ref, w1_ref, b1_ref, w2_ref, b2_ref,
                           w3_ref, b3_ref, o_ref):
    """One batch tile: fc1+ReLU -> fc2+ReLU -> fc3 -> log_softmax (narrow out)."""
    x = x_ref[...].astype(jnp.bfloat16)  # [TB, state_dim]

    # fc1 + ReLU  (bf16 MXU operands, f32 accumulate / elementwise)
    h1 = jnp.dot(x, w1_ref[...], preferred_element_type=jnp.float32) + b1_ref[...]
    h1 = jnp.maximum(h1, 0.0)

    # fc2 + ReLU
    h2 = jnp.dot(h1.astype(jnp.bfloat16), w2_ref[...],
                 preferred_element_type=jnp.float32) + b2_ref[...]
    h2 = jnp.maximum(h2, 0.0)

    # fc3 (logits), shape [TB, action_dim]
    logits = jnp.dot(h2.astype(jnp.bfloat16), w3_ref[...],
                     preferred_element_type=jnp.float32) + b3_ref[...]

    # Numerically-stable log_softmax along the action (lane) dimension.
    m = jnp.max(logits, axis=-1, keepdims=True)
    z = logits - m
    lse = jnp.log(jnp.sum(jnp.exp(z), axis=-1, keepdims=True))
    o_ref[...] = (z - lse).astype(o_ref.dtype)


def _pick_tile(B):
    """Batch tile size: single aligned tile for small B; for large B, 256-aligned
    tiles up to 1024 chosen so the grid has >= 2 steps (v7x megacore)."""
    if B <= 256:
        return max(8, ((B + 7) // 8) * 8)
    half = (B + 1) // 2
    return min(1024, ((half + 255) // 256) * 256)


@jax.jit
def model_forward(x, w1, b1, w2, b2, w3, b3):
    """x: [B, state_dim] f32; w*: [in, out] bf16; b*: [1, out] f32.
    Returns log_softmax(MLP(x)) as [B, action_dim] f32."""
    B, state_dim = x.shape
    width = w1.shape[1]
    action_dim = w3.shape[1]

    TB = _pick_tile(B)
    grid = (pl.cdiv(B, TB),)          # ragged last tile handled by Pallas (no pad)

    row_map = lambda i: (i, 0)        # batch tiles march down the rows
    const_map = lambda i: (0, 0)      # weights/biases: same block every step

    return pl.pallas_call(
        _mlp_logsoftmax_kernel,
        out_shape=jax.ShapeDtypeStruct((B, action_dim), jnp.float32),
        grid=grid,
        in_specs=[
            pl.BlockSpec((TB, state_dim), row_map),
            pl.BlockSpec((state_dim, width), const_map),
            pl.BlockSpec((1, width), const_map),
            pl.BlockSpec((width, width), const_map),
            pl.BlockSpec((1, width), const_map),
            pl.BlockSpec((width, action_dim), const_map),
            pl.BlockSpec((1, action_dim), const_map),
        ],
        out_specs=pl.BlockSpec((TB, action_dim), row_map),
        compiler_params=pltpu.CompilerParams(
            dimension_semantics=("parallel",),  # shard batch tiles across TCs (v7x)
        ),
    )(x, w1, b1, w2, b2, w3, b3)


def init_params(key, state_dim, action_dim, width=128):
    """nn.Linear-style U(-1/sqrt(fan_in), 1/sqrt(fan_in)) init, weights as [in, out]."""
    def linear(k, fan_in, fan_out):
        kw, kb = jax.random.split(k)
        bound = 1.0 / jnp.sqrt(jnp.float32(fan_in))
        w = jax.random.uniform(kw, (fan_in, fan_out), jnp.float32, -bound, bound)
        b = jax.random.uniform(kb, (fan_out,), jnp.float32, -bound, bound)
        return w, b

    k1, k2, k3 = jax.random.split(key, 3)
    w1, b1 = linear(k1, state_dim, width)
    w2, b2 = linear(k2, width, width)
    w3, b3 = linear(k3, width, action_dim)
    return w1, b1, w2, b2, w3, b3


def prepare_params(w1, b1, w2, b2, w3, b3):
    """One-time preprocessing (hoisted out of the forward pass): bf16 weights
    for the MXU, biases reshaped to [1, out] for lane broadcast."""
    return (w1.astype(jnp.bfloat16), b1.reshape(1, -1).astype(jnp.float32),
            w2.astype(jnp.bfloat16), b2.reshape(1, -1).astype(jnp.float32),
            w3.astype(jnp.bfloat16), b3.reshape(1, -1).astype(jnp.float32))


def _reference_forward(x, w1, b1, w2, b2, w3, b3):
    h1 = jnp.maximum(x @ w1 + b1, 0.0)
    h2 = jnp.maximum(h1 @ w2 + b2, 0.0)
    return jax.nn.log_softmax(h2 @ w3 + b3, axis=1)


def _check(out, x, raw_params, action_dim):
    assert out.shape == (x.shape[0], action_dim)
    row_sums = jnp.sum(jnp.exp(out), axis=1)
    assert bool(jnp.all(jnp.abs(row_sums - 1.0) < 1e-3))
    ref = _reference_forward(x, *raw_params)
    # bf16 MXU operands (f32 accumulation) -> loosened tolerance vs f32 ref.
    assert bool(jnp.allclose(out, ref, atol=2e-2, rtol=2e-2))


if __name__ == "__main__":
    state_dim = 8
    action_dim = 4
    width = 128

    key = jax.random.PRNGKey(0)
    k_params, k_x_small, k_x_big, k_x_ragged = jax.random.split(key, 4)
    raw_params = init_params(k_params, state_dim, action_dim, width)
    prepped = prepare_params(*raw_params)

    # Small toy batch (single partial tile, TB=8).
    x_small = jax.random.normal(k_x_small, (2, state_dim), jnp.float32)
    out_small = jax.block_until_ready(model_forward(x_small, *prepped))
    _check(out_small, x_small, raw_params, action_dim)

    # Larger batch: TB=256, grid=(2,), exact tiling.
    x_big = jax.random.normal(k_x_big, (512, state_dim), jnp.float32)
    out_big = jax.block_until_ready(model_forward(x_big, *prepped))
    _check(out_big, x_big, raw_params, action_dim)

    # Ragged batch: TB=256, grid=(2,), last tile partial (no host-side padding).
    x_ragged = jax.random.normal(k_x_ragged, (300, state_dim), jnp.float32)
    out_ragged = jax.block_until_ready(model_forward(x_ragged, *prepped))
    _check(out_ragged, x_ragged, raw_params, action_dim)

    print("KERNEL_OK")
</pallas_src>

<mosaic_0001>
module attributes {stable_mosaic.version = 11 : i64} {
  func.func @_mlp_logsoftmax_kernel(%arg0: i32, %arg1: memref<8x8xf32, #tpu.memory_space<vmem>>, %arg2: memref<8x128xbf16, #tpu.memory_space<vmem>>, %arg3: memref<1x128xf32, #tpu.memory_space<vmem>>, %arg4: memref<128x128xbf16, #tpu.memory_space<vmem>>, %arg5: memref<1x128xf32, #tpu.memory_space<vmem>>, %arg6: memref<128x4xbf16, #tpu.memory_space<vmem>>, %arg7: memref<1x4xf32, #tpu.memory_space<vmem>>, %arg8: memref<8x4xf32, #tpu.memory_space<vmem>>) attributes {dimension_semantics = [#tpu.dimension_semantics<parallel>], iteration_bounds = array<i64: 1>, scalar_prefetch = 0 : i64, scratch_operands = 0 : i64, tpu.core_type = #tpu.core_type<tc>, window_params = [{transform_indices = @transform_0, window_bounds = array<i64: 8, 8>}, {pipeline_mode = #tpu.pipeline_mode<synchronous>, transform_indices = @transform_1, window_bounds = array<i64: 8, 128>}, {pipeline_mode = #tpu.pipeline_mode<synchronous>, transform_indices = @transform_2, window_bounds = array<i64: 1, 128>}, {pipeline_mode = #tpu.pipeline_mode<synchronous>, transform_indices = @transform_3, window_bounds = array<i64: 128, 128>}, {pipeline_mode = #tpu.pipeline_mode<synchronous>, transform_indices = @transform_4, window_bounds = array<i64: 1, 128>}, {pipeline_mode = #tpu.pipeline_mode<synchronous>, transform_indices = @transform_5, window_bounds = array<i64: 128, 4>}, {pipeline_mode = #tpu.pipeline_mode<synchronous>, transform_indices = @transform_6, window_bounds = array<i64: 1, 4>}, {transform_indices = @transform_7, window_bounds = array<i64: 8, 4>}]} {
    %c0 = arith.constant 0 : index
    %c0_0 = arith.constant 0 : index
    %0 = vector.load %arg1[%c0, %c0_0] : memref<8x8xf32, #tpu.memory_space<vmem>>, vector<8x8xf32>
    %1 = arith.truncf %0 : vector<8x8xf32> to vector<8x8xbf16>
    %c0_1 = arith.constant 0 : index
    %c0_2 = arith.constant 0 : index
    %2 = vector.load %arg2[%c0_1, %c0_2] : memref<8x128xbf16, #tpu.memory_space<vmem>>, vector<8x128xbf16>
    %cst = arith.constant dense<0.000000e+00> : vector<8x128xf32>
    %3 = tpu.matmul %1, %2, %cst {dimension_numbers = #tpu.dot_dimension_numbers<[1], [0], [0], [1], [0, 0, 1, 1], [], []>} : vector<8x8xbf16>, vector<8x128xbf16>, vector<8x128xf32> -> vector<8x128xf32>
    %c0_3 = arith.constant 0 : index
    %c0_4 = arith.constant 0 : index
    %4 = vector.load %arg3[%c0_3, %c0_4] : memref<1x128xf32, #tpu.memory_space<vmem>>, vector<1x128xf32>
    %5 = vector.broadcast %4 : vector<1x128xf32> to vector<8x128xf32>
    %6 = arith.addf %3, %5 : vector<8x128xf32>
    %cst_5 = arith.constant 0.000000e+00 : f32
    %7 = vector.broadcast %cst_5 : f32 to vector<8x128xf32>
    %8 = arith.maximumf %6, %7 : vector<8x128xf32>
    %9 = arith.truncf %8 : vector<8x128xf32> to vector<8x128xbf16>
    %c0_6 = arith.constant 0 : index
    %c0_7 = arith.constant 0 : index
    %10 = vector.load %arg4[%c0_6, %c0_7] : memref<128x128xbf16, #tpu.memory_space<vmem>>, vector<128x128xbf16>
    %cst_8 = arith.constant dense<0.000000e+00> : vector<8x128xf32>
    %11 = tpu.matmul %9, %10, %cst_8 {dimension_numbers = #tpu.dot_dimension_numbers<[1], [0], [0], [1], [0, 0, 1, 1], [], []>} : vector<8x128xbf16>, vector<128x128xbf16>, vector<8x128xf32> -> vector<8x128xf32>
    %c0_9 = arith.constant 0 : index
    %c0_10 = arith.constant 0 : index
    %12 = vector.load %arg5[%c0_9, %c0_10] : memref<1x128xf32, #tpu.memory_space<vmem>>, vector<1x128xf32>
    %13 = vector.broadcast %12 : vector<1x128xf32> to vector<8x128xf32>
    %14 = arith.addf %11, %13 : vector<8x128xf32>
    %cst_11 = arith.constant 0.000000e+00 : f32
    %15 = vector.broadcast %cst_11 : f32 to vector<8x128xf32>
    %16 = arith.maximumf %14, %15 : vector<8x128xf32>
    %17 = arith.truncf %16 : vector<8x128xf32> to vector<8x128xbf16>
    %c0_12 = arith.constant 0 : index
    %c0_13 = arith.constant 0 : index
    %18 = vector.load %arg6[%c0_12, %c0_13] : memref<128x4xbf16, #tpu.memory_space<vmem>>, vector<128x4xbf16>
    %cst_14 = arith.constant dense<0.000000e+00> : vector<8x4xf32>
    %19 = tpu.matmul %17, %18, %cst_14 {dimension_numbers = #tpu.dot_dimension_numbers<[1], [0], [0], [1], [0, 0, 1, 1], [], []>} : vector<8x128xbf16>, vector<128x4xbf16>, vector<8x4xf32> -> vector<8x4xf32>
    %c0_15 = arith.constant 0 : index
    %c0_16 = arith.constant 0 : index
    %20 = vector.load %arg7[%c0_15, %c0_16] : memref<1x4xf32, #tpu.memory_space<vmem>>, vector<1x4xf32>
    %21 = vector.broadcast %20 : vector<1x4xf32> to vector<8x4xf32>
    %22 = arith.addf %19, %21 : vector<8x4xf32>
    %cst_17 = arith.constant dense<0xFF800000> : vector<8xf32>
    %23 = vector.multi_reduction <maximumf>, %22, %cst_17 [1] : vector<8x4xf32> to vector<8xf32>
    %24 = vector.shape_cast %23 : vector<8xf32> to vector<8x1xf32>
    %25 = vector.broadcast %24 : vector<8x1xf32> to vector<8x4xf32>
    %26 = arith.subf %22, %25 : vector<8x4xf32>
    %27 = math.exp %26 : vector<8x4xf32>
    %cst_18 = arith.constant dense<0.000000e+00> : vector<8xf32>
    %28 = vector.multi_reduction <add>, %27, %cst_18 [1] : vector<8x4xf32> to vector<8xf32>
    %29 = vector.shape_cast %28 : vector<8xf32> to vector<8x1xf32>
    %30 = math.log %29 : vector<8x1xf32>
    %31 = vector.broadcast %30 : vector<8x1xf32> to vector<8x4xf32>
    %32 = arith.subf %26, %31 : vector<8x4xf32>
    %c0_19 = arith.constant 0 : index
    %c0_20 = arith.constant 0 : index
    %33 = vector.load %arg8[%c0_19, %c0_20] : memref<8x4xf32, #tpu.memory_space<vmem>>, vector<8x4xf32>
    tpu.vector_store %arg8[%c0_19, %c0_20], %32 {strides = array<i32>} : memref<8x4xf32, #tpu.memory_space<vmem>>, vector<8x4xf32>,
    return
  }
  func.func @transform_0(%arg0: i32) -> (i32, i32) {
    %c0_i32 = arith.constant 0 : i32
    %c0_i32_0 = arith.constant 0 : i32
    return %arg0, %c0_i32 : i32, i32
  }
  func.func @transform_1(%arg0: i32) -> (i32, i32) {
    %c0_i32 = arith.constant 0 : i32
    %c0_i32_0 = arith.constant 0 : i32
    %c0_i32_1 = arith.constant 0 : i32
    return %c0_i32, %c0_i32_0 : i32, i32
  }
  func.func @transform_2(%arg0: i32) -> (i32, i32) {
    %c0_i32 = arith.constant 0 : i32
    %c0_i32_0 = arith.constant 0 : i32
    %c0_i32_1 = arith.constant 0 : i32
    return %c0_i32, %c0_i32_0 : i32, i32
  }
  func.func @transform_3(%arg0: i32) -> (i32, i32) {
    %c0_i32 = arith.constant 0 : i32
    %c0_i32_0 = arith.constant 0 : i32
    %c0_i32_1 = arith.constant 0 : i32
    return %c0_i32, %c0_i32_0 : i32, i32
  }
  func.func @transform_4(%arg0: i32) -> (i32, i32) {
    %c0_i32 = arith.constant 0 : i32
    %c0_i32_0 = arith.constant 0 : i32
    %c0_i32_1 = arith.constant 0 : i32
    return %c0_i32, %c0_i32_0 : i32, i32
  }
  func.func @transform_5(%arg0: i32) -> (i32, i32) {
    %c0_i32 = arith.constant 0 : i32
    %c0_i32_0 = arith.constant 0 : i32
    %c0_i32_1 = arith.constant 0 : i32
    return %c0_i32, %c0_i32_0 : i32, i32
  }
  func.func @transform_6(%arg0: i32) -> (i32, i32) {
    %c0_i32 = arith.constant 0 : i32
    %c0_i32_0 = arith.constant 0 : i32
    %c0_i32_1 = arith.constant 0 : i32
    return %c0_i32, %c0_i32_0 : i32, i32
  }
  func.func @transform_7(%arg0: i32) -> (i32, i32) {
    %c0_i32 = arith.constant 0 : i32
    %c0_i32_0 = arith.constant 0 : i32
    return %arg0, %c0_i32 : i32, i32
  }
}

</mosaic_0001>

<llo_original>
// kernel: model_forward.1
$region0: #{model_forward.1}
  #allocation0 [shape = 'u32[]', space=smem, size = 0x4, offset = 0x4, fixed_abs, tag = 'smem constant byte address 0x4 - core index']
  #allocation1 [shape = 'u32[144,128]{1,0:T(1,128)}', space=vmem, size = 0x12000, scoped, tag = 'internal scratch']
  %s0 = inlined_call_operand.vmem [shape: f32[2,8], index: 0, kind: input, shape index: {}]
  %s1 = inlined_call_operand.vmem [shape: bf16[8,128], index: 1, kind: input, shape index: {}]
  %s2 = inlined_call_operand.vmem [shape: f32[1,128], index: 2, kind: input, shape index: {}]
  %s3 = inlined_call_operand.vmem [shape: bf16[128,128], index: 3, kind: input, shape index: {}]
  %s4 = inlined_call_operand.hbm [shape: f32[1,128], index: 4, kind: input, shape index: {}]
  %s5 = inlined_call_operand.vmem [shape: bf16[128,4], index: 5, kind: input, shape index: {}]
  %s6 = inlined_call_operand.vmem [shape: f32[1,4], index: 6, kind: input, shape index: {}]
  %s7 = inlined_call_operand.hbm [shape: f32[2,4], index: 7, kind: output, shape index: {}]
  %s8 = sld [smem:[#allocation0]]
  $region42: #{model_forward.1} parent=0
    _
  %s10 = ssub.s32 1, %s8
  %s11 = scalar_select 0, %s10, %s8
  $region1: #{model_forward.1} parent=0
    #allocation2 [shape = 'u8[512]{0}', space=vmem, size = 0x400, scoped, tag = 'input window, operand 4, single buffered']
    #allocation3 [shape = 's32[1]{0}', space=sflag, size = 0x4, scoped, tag = 'scoped memory for model_forward.1']
    #allocation4 [shape = 's32[1]{0}', space=sflag, size = 0x4, scoped, tag = 'scoped memory for model_forward.1']
    #allocation5 [shape = 'u8[4096]{0}', space=vmem, size = 0x1000, scoped, tag = 'output window, operand 0, single buffered']
    %12 = vsyncpa [#allocation3], 0
    %13 = vsyncpa [#allocation4], 0
    // Predicated region
    $region2: #{model_forward.1} parent=1 // pred_check
      _
    $region3: #{model_forward.1} parent=1 // pred_check_branch
      %15 = sbr.rel (0) target = $region5
    $region4: #{model_forward.1} parent=1 // pred_region
      _
    $region5: #{model_forward.1} parent=1 // pred_fallthru
      _
    // Predicated region
    $region6: #{model_forward.1} parent=1 // pred_check
      _
    $region7: #{model_forward.1} parent=1 // pred_check_branch
      %17 = sbr.rel (0) target = $region9
    $region8: #{model_forward.1} parent=1 // pred_region
      _
    $region9: #{model_forward.1} parent=1 // pred_fallthru
      _
    // Predicated region
    $region10: #{model_forward.1} parent=1 // pred_check
      _
    $region11: #{model_forward.1} parent=1 // pred_check_branch
      %19 = sbr.rel (0) target = $region13
    $region12: #{model_forward.1} parent=1 // pred_region
      _
    $region13: #{model_forward.1} parent=1 // pred_fallthru
      _
    // Predicated region
    $region14: #{model_forward.1} parent=1 // pred_check
      _
    $region15: #{model_forward.1} parent=1 // pred_check_branch
      %21 = sbr.rel (0) target = $region17
    $region16: #{model_forward.1} parent=1 // pred_region
      _
    $region17: #{model_forward.1} parent=1 // pred_fallthru
      _
    // Predicated region
    $region18: #{model_forward.1} parent=1 // pred_check
      _
    $region19: #{model_forward.1} parent=1 // pred_check_branch
      %23 = sbr.rel (0) target = $region21
    $region20: #{model_forward.1} parent=1 // pred_region
      %s25 = ssub.s32 16, 16
      %26 = vsyncadd [#allocation3], %s25
      %s28 = sshll.u32 [#allocation2], 4
      %s29 = int_to_ptr.vmem [resolvable:$true] %s28
      %31 = dma.hbm_to_vmem [thread:$0]  %s4, 16, %s29, [#allocation3]
    $region21: #{model_forward.1} parent=1 // pred_fallthru
      _
    // Predicated region
    $region22: #{model_forward.1} parent=1 // pred_check
      _
    $region23: #{model_forward.1} parent=1 // pred_check_branch
      %33 = sbr.rel (0) target = $region25
    $region24: #{model_forward.1} parent=1 // pred_region
      _
    $region25: #{model_forward.1} parent=1 // pred_fallthru
      _
    // Predicated region
    $region26: #{model_forward.1} parent=1 // pred_check
      _
    $region27: #{model_forward.1} parent=1 // pred_check_branch
      %35 = sbr.rel (0) target = $region29
    $region28: #{model_forward.1} parent=1 // pred_region
      _
    $region29: #{model_forward.1} parent=1 // pred_fallthru
      _
    // Predicated region
    $region30: #{model_forward.1} parent=1 // pred_check
      _
    $region31: #{model_forward.1} parent=1 // pred_check_branch
      %37 = sbr.rel (0) target = $region33
    $region32: #{model_forward.1} parent=1 // pred_region
      %38 = dma.done [#allocation3], 16
    $region33: #{model_forward.1} parent=1 // pred_fallthru
      _
    %v40 = vld [vmem:[%s0] sm:$0xff]
    %v41 = vpack.c.bf16 %v40, %v40
    %v42 = vld [vmem:[%s1] sm:$0xf]
    %v43 = vld [vmem:[%s2] sm:$0x1]
    %v45 = vlaneseq
    %v46 = vshrl.u32 %v45, 7
    %v47 = vsub.s32 0, %v46
    %v48 = vrot.slane %v43, %v47
    %vm50 = vcmask 64512
    %v52 = vsel %vm50, %v41, 0
    %vm54 = vcmask 1043456
    %v56 = vsel %vm54, %v42, 0
    %58 = vmatprep.subr.bf16.mxu0 0
    %59 = vmatpush1.bf16.msra.mxu0 0
    %60 = vmatprep.subr.bf16.mxu0 0
    %61 = vmatpush1.bf16.msra.mxu0 0
    %62 = vmatprep.subr.bf16.mxu0 0
    %63 = vmatpush1.bf16.msra.mxu0 0
    %64 = vmatprep.subr.bf16.mxu0 0
    %65 = vmatpush1.bf16.msra.mxu0 0
    %66 = vmatprep.subr.bf16.mxu0 0
    %67 = vmatpush1.bf16.msra.mxu0 0
    %68 = vmatprep.subr.bf16.mxu0 0
    %69 = vmatpush1.bf16.msra.mxu0 0
    %70 = vmatprep.subr.bf16.mxu0 0
    %71 = vmatpush1.bf16.msra.mxu0 0
    %72 = vmatprep.subr.bf16.mxu0 0
    %73 = vmatpush1.bf16.msra.mxu0 %v56
    %74 = vmatprep.subr.bf16.mxu0 0
    %75 = vmatpush2.bf16.msra.mxu0 0
    %76 = vmatprep.subr.bf16.mxu0 0
    %77 = vmatpush2.bf16.msra.mxu0 0
    %78 = vmatprep.subr.bf16.mxu0 0
    %79 = vmatpush2.bf16.msra.mxu0 0
    %80 = vmatprep.subr.bf16.mxu0 0
    %81 = vmatpush2.bf16.msra.mxu0 0
    %82 = vmatprep.subr.bf16.mxu0 0
    %83 = vmatpush2.bf16.msra.mxu0 0
    %84 = vmatprep.subr.bf16.mxu0 0
    %85 = vmatpush2.bf16.msra.mxu0 0
    %86 = vmatprep.subr.bf16.mxu0 0
    %87 = vmatpush2.bf16.msra.mxu0 0
    %88 = vmatprep.subr.bf16.mxu0 0
    %89 = vmatpush2.bf16.msra.mxu0 0
    %90 = vmatprep.mubr.bf16.mxu0 0
    %91 = vmatmul.mubr.bf16.gmra.mxu0 %v52
    %v92 = vpop.f32.mrf.mxu0
    %v93 = vadd.f32 %v48, %v92
    %v94 = vpop.f32.mrf.mxu0
    %v95 = vpop.f32.mrf.mxu0
    %v96 = vpop.f32.mrf.mxu0
    %97 = vdwg.mxu0
    %v98 = vmax.f32 %v93, 0.0
    %v99 = vpack.c.bf16 %v98, %v98
    %v100 = vld [vmem:[%s3] sm:$0xf]
    %v101 = vld [vmem:[%s3 + $0x4] sm:$0xf]
    %v102 = vld [vmem:[%s3 + $0x8] sm:$0xf]
    %v103 = vld [vmem:[%s3 + $0xc] sm:$0xf]
    %v104 = vld [vmem:[%s3 + $0x10] sm:$0xf]
    %v105 = vld [vmem:[%s3 + $0x14] sm:$0xf]
    %v106 = vld [vmem:[%s3 + $0x18] sm:$0xf]
    %v107 = vld [vmem:[%s3 + $0x1c] sm:$0xf]
    %v108 = vld [vmem:[%s3 + $0x20] sm:$0xf]
    %v109 = vld [vmem:[%s3 + $0x24] sm:$0xf]
    %v110 = vld [vmem:[%s3 + $0x28] sm:$0xf]
    %v111 = vld [vmem:[%s3 + $0x2c] sm:$0xf]
    %v112 = vld [vmem:[%s3 + $0x30] sm:$0xf]
    %v113 = vld [vmem:[%s3 + $0x34] sm:$0xf]
    %v114 = vld [vmem:[%s3 + $0x38] sm:$0xf]
    %v115 = vld [vmem:[%s3 + $0x3c] sm:$0xf]
    %v116 = vld [vmem:[#allocation2] sm:$0x1]
    %v118 = vlaneseq
    %v119 = vshrl.u32 %v118, 7
    %v120 = vsub.s32 0, %v119
    %v121 = vrot.slane %v116, %v120
    %v139 = vunpack.c.l.b16 %v100
    %v140 = vunpack.c.l.b16 %v101
    %v141 = vunpack.c.l.b16 %v102
    %v142 = vunpack.c.l.b16 %v103
    %v143 = vunpack.c.l.b16 %v104
    %v144 = vunpack.c.l.b16 %v105
    %v145 = vunpack.c.l.b16 %v106
    %v146 = vunpack.c.l.b16 %v107
    %v147 = vunpack.c.l.b16 %v108
    %v148 = vunpack.c.l.b16 %v109
    %v149 = vunpack.c.l.b16 %v110
    %v150 = vunpack.c.l.b16 %v111
    %v151 = vunpack.c.l.b16 %v112
    %v152 = vunpack.c.l.b16 %v113
    %v153 = vunpack.c.l.b16 %v114
    %v154 = vunpack.c.l.b16 %v115
    %v155 = vpack.c.b16 %v140, %v139
    %v156 = vpack.c.b16 %v142, %v141
    %v157 = vpack.c.b16 %v144, %v143
    %v158 = vpack.c.b16 %v146, %v145
    %v159 = vpack.c.b16 %v148, %v147
    %v160 = vpack.c.b16 %v150, %v149
    %v161 = vpack.c.b16 %v152, %v151
    %v162 = vpack.c.b16 %v154, %v153
    %171 = vmatprep.subr.bf16.mxu0 0
    %172 = vmatpush1.bf16.msra.mxu0 %v162
    %173 = vmatprep.subr.bf16.mxu0 0
    %174 = vmatpush1.bf16.msra.mxu0 %v161
    %175 = vmatprep.subr.bf16.mxu0 0
    %176 = vmatpush1.bf16.msra.mxu0 %v160
    %177 = vmatprep.subr.bf16.mxu0 0
    %178 = vmatpush1.bf16.msra.mxu0 %v159
    %179 = vmatprep.subr.bf16.mxu0 0
    %180 = vmatpush1.bf16.msra.mxu0 %v158
    %181 = vmatprep.subr.bf16.mxu0 0
    %182 = vmatpush1.bf16.msra.mxu0 %v157
    %183 = vmatprep.subr.bf16.mxu0 0
    %184 = vmatpush1.bf16.msra.mxu0 %v156
    %185 = vmatprep.subr.bf16.mxu0 0
    %186 = vmatpush1.bf16.msra.mxu0 %v155
    %187 = vmatprep.subr.bf16.mxu0 0
    %188 = vmatpush2.bf16.msra.mxu0 0
    %189 = vmatprep.subr.bf16.mxu0 0
    %190 = vmatpush2.bf16.msra.mxu0 0
    %191 = vmatprep.subr.bf16.mxu0 0
    %192 = vmatpush2.bf16.msra.mxu0 0
    %193 = vmatprep.subr.bf16.mxu0 0
    %194 = vmatpush2.bf16.msra.mxu0 0
    %195 = vmatprep.subr.bf16.mxu0 0
    %196 = vmatpush2.bf16.msra.mxu0 0
    %197 = vmatprep.subr.bf16.mxu0 0
    %198 = vmatpush2.bf16.msra.mxu0 0
    %199 = vmatprep.subr.bf16.mxu0 0
    %200 = vmatpush2.bf16.msra.mxu0 0
    %201 = vmatprep.subr.bf16.mxu0 0
    %202 = vmatpush2.bf16.msra.mxu0 0
    %203 = vmatprep.mubr.bf16.mxu0 0
    %204 = vmatmul.mubr.bf16.gmra.mxu0 %v99
    %v205 = vpop.f32.mrf.mxu0
    %v206 = vadd.f32 %v121, %v205
    %v207 = vpop.f32.mrf.mxu0
    %v208 = vpop.f32.mrf.mxu0
    %v209 = vpop.f32.mrf.mxu0
    %210 = vdwg.mxu0
    %v211 = vmax.f32 %v206, 0.0
    %v212 = vpack.c.bf16 %v211, %v211
    %v213 = vld [vmem:[%s5] sm:$0xf]
    %v214 = vld [vmem:[%s5 + $0x4] sm:$0xf]
    %v215 = vld [vmem:[%s5 + $0x8] sm:$0xf]
    %v216 = vld [vmem:[%s5 + $0xc] sm:$0xf]
    %v217 = vld [vmem:[%s5 + $0x10] sm:$0xf]
    %v218 = vld [vmem:[%s5 + $0x14] sm:$0xf]
    %v219 = vld [vmem:[%s5 + $0x18] sm:$0xf]
    %v220 = vld [vmem:[%s5 + $0x1c] sm:$0xf]
    %v221 = vld [vmem:[%s5 + $0x20] sm:$0xf]
    %v222 = vld [vmem:[%s5 + $0x24] sm:$0xf]
    %v223 = vld [vmem:[%s5 + $0x28] sm:$0xf]
    %v224 = vld [vmem:[%s5 + $0x2c] sm:$0xf]
    %v225 = vld [vmem:[%s5 + $0x30] sm:$0xf]
    %v226 = vld [vmem:[%s5 + $0x34] sm:$0xf]
    %v227 = vld [vmem:[%s5 + $0x38] sm:$0xf]
    %v228 = vld [vmem:[%s5 + $0x3c] sm:$0xf]
    %v229 = vld [vmem:[%s6] sm:$0x1]
    %v231 = vlaneseq
    %v232 = vshrl.u32 %v231, 7
    %v233 = vsub.s32 0, %v232
    %v234 = vrot.slane %v229, %v233
    %v252 = vunpack.c.l.b16 %v213
    %v253 = vunpack.c.l.b16 %v214
    %v254 = vunpack.c.l.b16 %v215
    %v255 = vunpack.c.l.b16 %v216
    %v256 = vunpack.c.l.b16 %v217
    %v257 = vunpack.c.l.b16 %v218
    %v258 = vunpack.c.l.b16 %v219
    %v259 = vunpack.c.l.b16 %v220
    %v260 = vunpack.c.l.b16 %v221
    %v261 = vunpack.c.l.b16 %v222
    %v262 = vunpack.c.l.b16 %v223
    %v263 = vunpack.c.l.b16 %v224
    %v264 = vunpack.c.l.b16 %v225
    %v265 = vunpack.c.l.b16 %v226
    %v266 = vunpack.c.l.b16 %v227
    %v267 = vunpack.c.l.b16 %v228
    %v268 = vpack.c.b16 %v253, %v252
    %v269 = vpack.c.b16 %v255, %v254
    %v270 = vpack.c.b16 %v257, %v256
    %v271 = vpack.c.b16 %v259, %v258
    %v272 = vpack.c.b16 %v261, %v260
    %v273 = vpack.c.b16 %v263, %v262
    %v274 = vpack.c.b16 %v265, %v264
    %v275 = vpack.c.b16 %v267, %v266
    %284 = vmatprep.subr.bf16.mxu0 0
    %285 = vmatpush1.bf16.msra.mxu0 %v275
    %286 = vmatprep.subr.bf16.mxu0 0
    %287 = vmatpush1.bf16.msra.mxu0 %v274
    %288 = vmatprep.subr.bf16.mxu0 0
    %289 = vmatpush1.bf16.msra.mxu0 %v273
    %290 = vmatprep.subr.bf16.mxu0 0
    %291 = vmatpush1.bf16.msra.mxu0 %v272
    %292 = vmatprep.subr.bf16.mxu0 0
    %293 = vmatpush1.bf16.msra.mxu0 %v271
    %294 = vmatprep.subr.bf16.mxu0 0
    %295 = vmatpush1.bf16.msra.mxu0 %v270
    %296 = vmatprep.subr.bf16.mxu0 0
    %297 = vmatpush1.bf16.msra.mxu0 %v269
    %298 = vmatprep.subr.bf16.mxu0 0
    %299 = vmatpush1.bf16.msra.mxu0 %v268
    %300 = vmatprep.subr.bf16.mxu0 0
    %301 = vmatpush2.bf16.msra.mxu0 0
    %302 = vmatprep.subr.bf16.mxu0 0
    %303 = vmatpush2.bf16.msra.mxu0 0
    %304 = vmatprep.subr.bf16.mxu0 0
    %305 = vmatpush2.bf16.msra.mxu0 0
    %306 = vmatprep.subr.bf16.mxu0 0
    %307 = vmatpush2.bf16.msra.mxu0 0
    %308 = vmatprep.subr.bf16.mxu0 0
    %309 = vmatpush2.bf16.msra.mxu0 0
    %310 = vmatprep.subr.bf16.mxu0 0
    %311 = vmatpush2.bf16.msra.mxu0 0
    %312 = vmatprep.subr.bf16.mxu0 0
    %313 = vmatpush2.bf16.msra.mxu0 0
    %314 = vmatprep.subr.bf16.mxu0 0
    %315 = vmatpush2.bf16.msra.mxu0 0
    %316 = vmatprep.mubr.bf16.mxu0 0
    %317 = vmatmul.mubr.bf16.gmra.mxu0 %v212
    %v318 = vpop.f32.mrf.mxu0
    %v319 = vadd.f32 %v234, %v318
    %v320 = vpop.f32.mrf.mxu0
    %v321 = vpop.f32.mrf.mxu0
    %v322 = vpop.f32.mrf.mxu0
    %323 = vdwg.mxu0
    %vm324 = vcmask 31744
    %v325 = vsel %vm324, %v319, -inf
    %326 = vmax.xlane.f32.xlu0 %v325
    %v327 = vpop.xlane.xlu0 %326
    %v328 = vsub.f32 %v319, %v327
    %v329 = vmul.f32 %v328, 1.442695
    %v330 = vpow.pop %v329
    %v331 = vsel %vm324, %v330, 0.0
    %332 = vadd.xlane.f32.xlu0 %v331
    %v333 = vpop.xlane.xlu0 %332
    %v334 = vlog2.pop %v333
    %v335 = vmul.f32 %v334, 0.6931472
    %v336 = vsub.f32 %v328, %v335
    %337 = vst.msk [vmem:[#allocation5] sm:$0xff] %vm324, %v336
    // Predicated region
    $region34: #{model_forward.1} parent=1 // pred_check
      _
    $region35: #{model_forward.1} parent=1 // pred_check_branch
      %339 = sbr.rel (0) target = $region37
    $region36: #{model_forward.1} parent=1 // pred_region
      %s341 = ssub.s32 128, 32
      %342 = vsyncadd [#allocation4], %s341
      %s343 = sshll.u32 [#allocation5], 4
      %s344 = int_to_ptr.vmem [resolvable:$true] %s343
      %349 = dma.vmem_to_hbm [thread:$0]  %s344, 32, %s7, [#allocation4], 32, 32, 2
    $region37: #{model_forward.1} parent=1 // pred_fallthru
      _
    // Predicated region
    $region38: #{model_forward.1} parent=1 // pred_check
      _
    $region39: #{model_forward.1} parent=1 // pred_check_branch
      %351 = sbr.rel (0) target = $region41
    $region40: #{model_forward.1} parent=1 // pred_region
      %352 = dma.done [#allocation4], 128
    $region41: #{model_forward.1} parent=1 // pred_fallthru
      _
    %353 = vsyncpa [#allocation3], 1
    %354 = vsyncpa [#allocation4], 1

</llo_original>
